<compile_context>
chip_gen: v7x
topology: tpu7x:2x2x1
jax: 0.10.0
libtpu: 0.0.40
codegen_flags: <defaults>
</compile_context>

<pallas_src>
import functools

import jax
import jax.numpy as jnp
from jax.experimental import pallas as pl
from jax.experimental.pallas import tpu as pltpu


def _round_up(x, m):
    return ((x + m - 1) // m) * m


def _causal_conv1d_kernel(x_ref, w_ref, b_ref, o_ref, halo_ref, *,
                          kernel_size, dilation, pad, halo_w, c_pad,
                          carry_halo):
    # x_ref:    (NB, C_in, TL)         current length tile of the input
    # w_ref:    (C_out, K*C_pad)       weight, taps folded into contraction dim
    #                                  (channel axis zero-padded to C_pad)
    # b_ref:    (C_out, 1)             bias
    # o_ref:    (NB, C_out, TL)        output tile
    # halo_ref: (NB, C_in, HW)         VMEM carry: last HW (>=128, lane-aligned)
    #                                  columns of the previous length tile;
    #                                  zeros at t == 0 (the causal zero pad).
    t = pl.program_id(1)
    nb, c_in, tl = x_ref.shape

    @pl.when(t == 0)
    def _init_halo():
        halo_ref[...] = jnp.zeros_like(halo_ref)

    x_tile = x_ref[...]          # (NB, C_in, TL)
    halo = halo_ref[...]         # (NB, C_in, HW)

    if carry_halo:
        # Carry the tail of this tile as the next tile's left halo.  The slice
        # start (TL - HW) is a 128-multiple -> lane-aligned copy.  Skip it on
        # the last (possibly ragged) length tile.
        @pl.when(t + 1 < pl.num_programs(1))
        def _store_halo():
            halo_ref[...] = x_tile[:, :, tl - halo_w:]

    # Left-extend the tile with the halo; the concat boundary sits at a
    # 128-lane multiple (HW is a multiple of 128), so this is a cheap copy.
    xp = jnp.concatenate([halo, x_tile], axis=-1)            # (NB, C_in, HW+TL)
    if c_pad > c_in:
        # Zero-pad channels to a sublane multiple so the K-tap stacking below
        # happens at aligned sublane offsets (no per-tap sublane relayout).
        zeros = jnp.zeros((nb, c_pad - c_in, halo_w + tl), dtype=xp.dtype)
        xp = jnp.concatenate([xp, zeros], axis=1)             # (NB, C_pad, HW+TL)

    base = halo_w - pad
    # K dilated taps, built once per tile for all NB rows and stacked along the
    # (sublane-aligned) channel axis: stacked[j*C_pad + c, l] = x[c, l + j*d - pad].
    taps = jnp.concatenate(
        [xp[:, :, base + j * dilation: base + j * dilation + tl]
         for j in range(kernel_size)],
        axis=1)                                               # (NB, K*C_pad, TL)

    # Fuse the NB batch rows along the lane axis -> ONE wide MXU matmul per tile.
    if nb > 1:
        stacked = jnp.concatenate([taps[n] for n in range(nb)], axis=-1)
    else:
        stacked = taps[0]                                     # (K*C_pad, NB*TL)

    acc = jnp.dot(w_ref[...], stacked,
                  preferred_element_type=jnp.float32)         # (C_out, NB*TL)
    acc = acc + b_ref[...]                                    # bias broadcast

    for n in range(nb):                                       # TL-aligned slices
        o_ref[n] = acc[:, n * tl:(n + 1) * tl].astype(o_ref.dtype)


def causal_conv1d(x, weight, bias, *, dilation=1, block_l=None, block_n=None,
                  target_block_bytes=2 << 20, vmem_budget_bytes=40 << 20):
    """x: (N, C_in, L), weight: (C_out, C_in, K), bias: (C_out,) -> (N, C_out, L)."""
    N, C_in, L = x.shape
    C_out, C_in_w, K = weight.shape
    assert C_in_w == C_in
    pad = (K - 1) * dilation
    # The original module slices x[:, :, :-pad]; kernel_size==1 (pad==0) is
    # degenerate there (empty output), so it is not supported here.
    assert pad >= 1, "kernel_size=1 / dilation such that pad==0 is not supported"

    isz = x.dtype.itemsize
    sub = max(8, 32 // isz)              # sublanes per vreg: f32 -> 8, bf16 -> 16
    C_pad = _round_up(C_in, sub)
    HW = _round_up(pad, 128)             # lane-aligned halo width

    # ---- batch block: default leaves >= 2 blocks when N >= 2 (v7x megacore) --
    if block_n is not None:
        NB = max(1, min(block_n, N))
    else:
        NB = min(8, N)
        if N >= 2:
            NB = max(1, min(NB, -(-N // 2)))

    def footprint(nb, tl):
        xb = nb * C_in * tl * isz                  # input block
        ob = nb * C_out * tl * isz                 # output block
        halo = nb * C_in * HW * isz                # halo scratch
        xp = nb * C_pad * (HW + tl) * isz          # padded concat temp
        stk = K * C_pad * nb * tl * isz            # stacked MXU operand
        acc = C_out * nb * tl * 4                  # f32 accumulator
        wb = C_out * (K * C_pad + 1) * isz         # weight + bias
        return 2 * (xb + ob) + halo + xp + stk + acc + 2 * wb

    # ---- length tile from a VMEM byte budget ---------------------------------
    if block_l is not None:
        TL = min(block_l, L)
    elif L <= 512:
        TL = L
    else:
        tl = target_block_bytes // max(1, NB * C_in * isz)
        tl = max(512, HW, (tl // 128) * 128)
        TL = L if tl >= L else tl

    # Shrink tiles until the estimated footprint fits the budget (v7x: 64 MiB VMEM).
    while (footprint(NB, TL) > vmem_budget_bytes and TL > max(HW, 128)
           and TL % 128 == 0):
        TL = max(((TL // 2) // 128) * 128, HW, 128)
    while footprint(NB, TL) > vmem_budget_bytes and NB > 1:
        NB = max(1, NB // 2)

    n_bblk = pl.cdiv(N, NB)
    n_lblk = pl.cdiv(L, TL)
    if n_lblk > 1:
        assert TL % 128 == 0, "length tile must be a multiple of 128 when tiling"
        assert TL >= HW, "halo carry needs length tile >= halo width"

    # Raise the scoped VMEM limit (defaults: 16 MiB v5e / 32 MiB v6e,v7x) so the
    # larger tiles compile with full double-buffering; stay under v7x's 64 MiB.
    vmem_limit = int(min(56 << 20, max(32 << 20, int(1.5 * footprint(NB, TL)))))

    # Param reshapes in plain JAX (tiny, resident in VMEM across the grid):
    # w_flat[o, j*C_pad + c] == weight[o, c, j] for c < C_in, zero otherwise.
    w_perm = jnp.transpose(weight, (0, 2, 1))                     # (C_out, K, C_in)
    w_perm = jnp.pad(w_perm, ((0, 0), (0, 0), (0, C_pad - C_in)))
    w_flat = w_perm.reshape(C_out, K * C_pad)
    b2d = bias.reshape(C_out, 1)

    kernel = functools.partial(
        _causal_conv1d_kernel,
        kernel_size=K,
        dilation=dilation,
        pad=pad,
        halo_w=HW,
        c_pad=C_pad,
        carry_halo=(n_lblk > 1),
    )

    cost = pl.CostEstimate(
        flops=2 * N * C_out * C_in * K * L,
        transcendentals=0,
        bytes_accessed=(N * L * (C_in + C_out) * isz
                        + C_out * (K * C_pad + 1) * isz),
    )

    out = pl.pallas_call(
        kernel,
        out_shape=jax.ShapeDtypeStruct((N, C_out, L), x.dtype),
        grid_spec=pltpu.PrefetchScalarGridSpec(
            num_scalar_prefetch=0,
            grid=(n_bblk, n_lblk),
            in_specs=[
                pl.BlockSpec((NB, C_in, TL), lambda b, t: (b, 0, t)),
                pl.BlockSpec((C_out, K * C_pad), lambda b, t: (0, 0)),
                pl.BlockSpec((C_out, 1), lambda b, t: (0, 0)),
            ],
            out_specs=pl.BlockSpec((NB, C_out, TL), lambda b, t: (b, 0, t)),
            scratch_shapes=[pltpu.VMEM((NB, C_in, HW), x.dtype)],
        ),
        compiler_params=pltpu.CompilerParams(
            # batch blocks are independent (megacore on v7x); the length axis
            # carries the halo scratch so it must stay sequential.
            dimension_semantics=("parallel", "arbitrary"),
            vmem_limit_bytes=vmem_limit,
        ),
        cost_estimate=cost,
    )(x, w_flat, b2d)
    return out


def causal_conv1d_ref(x, weight, bias, *, dilation=1):
    """Pure-JAX reference matching PyTorch CausalConv1d.forward."""
    N, C_in, L = x.shape
    C_out, _, K = weight.shape
    pad = (K - 1) * dilation
    x_pad = jnp.pad(x, ((0, 0), (0, 0), (pad, 0)))
    out = jnp.zeros((N, C_out, L), dtype=jnp.float32)
    for j in range(K):
        xs = x_pad[:, :, j * dilation:j * dilation + L]      # (N, C_in, L)
        out = out + jnp.einsum("oc,ncl->nol", weight[:, :, j], xs)
    return (out + bias[None, :, None]).astype(x.dtype)


if __name__ == "__main__":
    key = jax.random.PRNGKey(0)

    # --- test 1: shapes consistent with the module's forward (small) ---------
    N, C_in, C_out, L, K, dilation = 2, 4, 8, 16, 3, 2
    kx, kw, kb, key = jax.random.split(key, 4)
    x = jax.random.normal(kx, (N, C_in, L), dtype=jnp.float32)
    weight = 0.1 * jax.random.normal(kw, (C_out, C_in, K), dtype=jnp.float32)
    bias = 0.1 * jax.random.normal(kb, (C_out,), dtype=jnp.float32)

    out = jax.block_until_ready(causal_conv1d(x, weight, bias, dilation=dilation))
    ref = causal_conv1d_ref(x, weight, bias, dilation=dilation)
    assert out.shape == (N, C_out, L)
    assert jnp.allclose(out, ref, atol=1e-5, rtol=1e-5)

    # --- test 2: length tiling + halo carry + fused batch rows (ragged edges) -
    N2, C2_in, C2_out, L2, K2, d2 = 3, 4, 8, 320, 3, 2
    kx2, kw2, kb2, key = jax.random.split(key, 4)
    x2 = jax.random.normal(kx2, (N2, C2_in, L2), dtype=jnp.float32)
    w2 = 0.1 * jax.random.normal(kw2, (C2_out, C2_in, K2), dtype=jnp.float32)
    b2 = 0.1 * jax.random.normal(kb2, (C2_out,), dtype=jnp.float32)

    out2 = jax.block_until_ready(
        causal_conv1d(x2, w2, b2, dilation=d2, block_l=128))
    ref2 = causal_conv1d_ref(x2, w2, b2, dilation=d2)
    assert out2.shape == (N2, C2_out, L2)
    assert jnp.allclose(out2, ref2, atol=1e-5, rtol=1e-5)

    # --- test 3: sublane-aligned channels, larger dilation, NB=2 lane fusion --
    N3, C3_in, C3_out, L3, K3, d3 = 4, 8, 16, 640, 3, 4
    kx3, kw3, kb3, key = jax.random.split(key, 4)
    x3 = jax.random.normal(kx3, (N3, C3_in, L3), dtype=jnp.float32)
    w3 = 0.1 * jax.random.normal(kw3, (C3_out, C3_in, K3), dtype=jnp.float32)
    b3 = 0.1 * jax.random.normal(kb3, (C3_out,), dtype=jnp.float32)

    out3 = jax.block_until_ready(
        causal_conv1d(x3, w3, b3, dilation=d3, block_l=256))
    ref3 = causal_conv1d_ref(x3, w3, b3, dilation=d3)
    assert out3.shape == (N3, C3_out, L3)
    assert jnp.allclose(out3, ref3, atol=1e-5, rtol=1e-5)

    print("KERNEL_OK")
</pallas_src>

<mosaic_0001>
module attributes {stable_mosaic.version = 11 : i64} {
  func.func @_causal_conv1d_kernel(%arg0: i32, %arg1: i32, %arg2: memref<1x4x16xf32, #tpu.memory_space<vmem>>, %arg3: memref<8x24xf32, #tpu.memory_space<vmem>>, %arg4: memref<8x1xf32, #tpu.memory_space<vmem>>, %arg5: memref<1x8x16xf32, #tpu.memory_space<vmem>>, %arg6: memref<1x4x128xf32, #tpu.memory_space<vmem>>) attributes {dimension_semantics = [#tpu.dimension_semantics<parallel>, #tpu.dimension_semantics<arbitrary>], iteration_bounds = array<i64: 2, 1>, scalar_prefetch = 0 : i64, scratch_operands = 1 : i64, tpu.core_type = #tpu.core_type<tc>, window_params = [{transform_indices = @transform_0, window_bounds = array<i64: 1, 4, 16>}, {pipeline_mode = #tpu.pipeline_mode<synchronous>, transform_indices = @transform_1, window_bounds = array<i64: 8, 24>}, {pipeline_mode = #tpu.pipeline_mode<synchronous>, transform_indices = @transform_2, window_bounds = array<i64: 8, 1>}, {transform_indices = @transform_3, window_bounds = array<i64: 1, 8, 16>}]} {
    %c0_i32 = arith.constant 0 : i32
    %0 = arith.cmpi eq, %arg1, %c0_i32 : i32
    %1 = arith.extui %0 : i1 to i32
    %c0_i32_0 = arith.constant 0 : i32
    %2 = arith.cmpi ne, %1, %c0_i32_0 : i32
    scf.if %2 {
      %cst_14 = arith.constant 0.000000e+00 : f32
      %21 = vector.broadcast %cst_14 : f32 to vector<1x4x128xf32>
      %c0_15 = arith.constant 0 : index
      %c0_16 = arith.constant 0 : index
      %c0_17 = arith.constant 0 : index
      %22 = vector.load %arg6[%c0_15, %c0_16, %c0_17] : memref<1x4x128xf32, #tpu.memory_space<vmem>>, vector<1x4x128xf32>
      tpu.vector_store %arg6[%c0_15, %c0_16, %c0_17], %21 {strides = array<i32>} : memref<1x4x128xf32, #tpu.memory_space<vmem>>, vector<1x4x128xf32>,
    } else {
    }
    %c0 = arith.constant 0 : index
    %c0_1 = arith.constant 0 : index
    %c0_2 = arith.constant 0 : index
    %3 = vector.load %arg2[%c0, %c0_1, %c0_2] : memref<1x4x16xf32, #tpu.memory_space<vmem>>, vector<1x4x16xf32>
    %c0_3 = arith.constant 0 : index
    %c0_4 = arith.constant 0 : index
    %c0_5 = arith.constant 0 : index
    %4 = vector.load %arg6[%c0_3, %c0_4, %c0_5] : memref<1x4x128xf32, #tpu.memory_space<vmem>>, vector<1x4x128xf32>
    %5 = tpu.concatenate %4, %3 in 2 : vector<1x4x128xf32>, vector<1x4x16xf32> -> vector<1x4x144xf32>
    %cst = arith.constant 0.000000e+00 : f32
    %6 = vector.broadcast %cst : f32 to vector<1x4x144xf32>
    %7 = tpu.concatenate %5, %6 in 1 : vector<1x4x144xf32>, vector<1x4x144xf32> -> vector<1x8x144xf32>
    %8 = vector.extract_strided_slice %7 {offsets = [0, 0, 124], sizes = [1, 8, 16], strides = [1, 1, 1]} : vector<1x8x144xf32> to vector<1x8x16xf32>
    %9 = vector.extract_strided_slice %7 {offsets = [0, 0, 126], sizes = [1, 8, 16], strides = [1, 1, 1]} : vector<1x8x144xf32> to vector<1x8x16xf32>
    %10 = vector.extract_strided_slice %7 {offsets = [0, 0, 128], sizes = [1, 8, 16], strides = [1, 1, 1]} : vector<1x8x144xf32> to vector<1x8x16xf32>
    %11 = tpu.concatenate %8, %9, %10 in 1 : vector<1x8x16xf32>, vector<1x8x16xf32>, vector<1x8x16xf32> -> vector<1x24x16xf32>
    %12 = vector.shape_cast %11 : vector<1x24x16xf32> to vector<24x16xf32>
    %c0_6 = arith.constant 0 : index
    %c0_7 = arith.constant 0 : index
    %13 = vector.load %arg3[%c0_6, %c0_7] : memref<8x24xf32, #tpu.memory_space<vmem>>, vector<8x24xf32>
    %cst_8 = arith.constant dense<0.000000e+00> : vector<8x16xf32>
    %14 = tpu.matmul %13, %12, %cst_8 {dimension_numbers = #tpu.dot_dimension_numbers<[1], [0], [0], [1], [0, 0, 1, 1], [], []>} : vector<8x24xf32>, vector<24x16xf32>, vector<8x16xf32> -> vector<8x16xf32>
    %c0_9 = arith.constant 0 : index
    %c0_10 = arith.constant 0 : index
    %15 = vector.load %arg4[%c0_9, %c0_10] : memref<8x1xf32, #tpu.memory_space<vmem>>, vector<8x1xf32>
    %16 = vector.broadcast %15 : vector<8x1xf32> to vector<8x16xf32>
    %17 = arith.addf %14, %16 : vector<8x16xf32>
    %c0_11 = arith.constant 0 : index
    %c0_12 = arith.constant 0 : index
    %c0_13 = arith.constant 0 : index
    %18 = vector.load %arg5[%c0_11, %c0_12, %c0_13] : memref<1x8x16xf32, #tpu.memory_space<vmem>>, vector<1x8x16xf32>
    %19 = vector.shape_cast %18 : vector<1x8x16xf32> to vector<8x16xf32>
    %20 = vector.shape_cast %17 : vector<8x16xf32> to vector<1x8x16xf32>
    tpu.vector_store %arg5[%c0_11, %c0_12, %c0_13], %20 {strides = array<i32>} : memref<1x8x16xf32, #tpu.memory_space<vmem>>, vector<1x8x16xf32>,
    return
  }
  func.func @transform_0(%arg0: i32, %arg1: i32) -> (i32, i32, i32) {
    %c0_i32 = arith.constant 0 : i32
    %c0_i32_0 = arith.constant 0 : i32
    return %arg0, %c0_i32, %arg1 : i32, i32, i32
  }
  func.func @transform_1(%arg0: i32, %arg1: i32) -> (i32, i32) {
    %c0_i32 = arith.constant 0 : i32
    %c0_i32_0 = arith.constant 0 : i32
    %c0_i32_1 = arith.constant 0 : i32
    return %c0_i32, %c0_i32_0 : i32, i32
  }
  func.func @transform_2(%arg0: i32, %arg1: i32) -> (i32, i32) {
    %c0_i32 = arith.constant 0 : i32
    %c0_i32_0 = arith.constant 0 : i32
    %c0_i32_1 = arith.constant 0 : i32
    return %c0_i32, %c0_i32_0 : i32, i32
  }
  func.func @transform_3(%arg0: i32, %arg1: i32) -> (i32, i32, i32) {
    %c0_i32 = arith.constant 0 : i32
    %c0_i32_0 = arith.constant 0 : i32
    return %arg0, %c0_i32, %arg1 : i32, i32, i32
  }
}

</mosaic_0001>

<llo_original>
// kernel: tpu_custom_call.1
$region0: #{tpu_custom_call.1}
  #allocation0 [shape = 'u32[]', space=smem, size = 0x4, offset = 0x4, fixed_abs, tag = 'smem constant byte address 0x4 - core index']
  #allocation1 [shape = 'u32[144,128]{1,0:T(1,128)}', space=vmem, size = 0x12000, scoped, tag = 'internal scratch']
  #allocation2 [shape = 'f32[1,4,128]{2,1,0:T(4,128)}', space=vmem, size = 0x800, scoped, tag = 'scratch operand']
  %s0 = inlined_call_operand.vmem [shape: f32[2,4,16], index: 0, kind: input, shape index: {}]
  %s1 = inlined_call_operand.hbm [shape: f32[8,24], index: 1, kind: input, shape index: {}]
  %s2 = inlined_call_operand.vmem [shape: f32[8,1], index: 2, kind: input, shape index: {}]
  %s3 = inlined_call_operand.hbm [shape: f32[2,8,16], index: 3, kind: output, shape index: {}]
  %s4 = sld [smem:[#allocation0]]
  $region53: #{tpu_custom_call.1} parent=0
    _
  %s6 = ssub.s32 1, %s4
  %s7 = scalar_select 0, %s6, %s4
  $region1: #{tpu_custom_call.1} parent=0
    #allocation3 [shape = 'u8[4096]{0}', space=vmem, size = 0x1000, scoped, tag = 'input window, operand 1, single buffered']
    #allocation4 [shape = 's32[2]{0}', space=sflag, size = 0x8, scoped, tag = 'scoped memory for tpu_custom_call.1']
    #allocation5 [shape = 's32[2]{0}', space=sflag, size = 0x8, scoped, tag = 'scoped memory for tpu_custom_call.1']
    #allocation6 [shape = 'u8[8192]{0}', space=vmem, size = 0x2000, scoped, tag = 'output window, operand 0']
    %8 = vsyncpa [#allocation4], 0
    %9 = vsyncpa [#allocation5], 0
    %s10 = scalar_lea.sflag [#allocation5], 1
    %11 = vsyncpa %s10, 0
    loop: start=0, step=1, limit=4
    $region2: #{tpu_custom_call.1} parent=1 // loop_pre_header
      _
    $region3: #{tpu_custom_call.1} parent=1 // loop_header
      %s13 = sphi 0, %s17
      %p14 = scmp.ge.s32.totalorder %s13, 4
      %s20 = sphi 0, %s32
      %s21 = sphi 0, %s28
      %s22 = sphi 0, %s20
      %s23 = sphi 0, %s21
      %s24 = sphi 0, %s22
      %s25 = sphi 0, %s23
      %s37 = sphi 0, %s39
      %s40 = sphi 0, %s37
      %s41 = sphi 0, %s40
      %s57 = sphi 0, %s41
      %s61 = sphi 0, %s61
      %s63 = sphi 0, %s61
      %s64 = sphi 0, %s63
      %s78 = sphi 0, %s64
      %s82 = sphi 0, %s82
      %s84 = sphi 0, %s82
      %s85 = sphi 0, %s84
      %s99 = sphi 0, %s85
      %s107 = sphi 0, %s109
      %s110 = sphi 0, %s107
      %s111 = sphi 0, %s110
      %s127 = sphi 0, %s111
    $region4: #{tpu_custom_call.1} parent=1 // loop_header_branch
      %16 = sbr.rel (%p14) target = $region8
    $region5: #{tpu_custom_call.1} parent=1 // loop_body
      %s18 = ssub.s32 %s13, 1
      %s19 = ssub.s32 %s13, 2
      %s26 = sadd.s32 1, %s21
      %p27 = scmp.ge.s32.totalorder %s26, 1
      %s28 = scalar_select %p27, 0, %s26
      %s29 = sadd.s32 1, %s20
      %s30 = scalar_select %p27, %s29, %s20
      %p31 = scmp.ge.s32.totalorder %s30, 2
      %s32 = scalar_select %p31, 0, %s30
      %s33 = ssub.s32 %s20, %s32
      %s34 = ssub.s32 %s21, %s28
      %s35 = sor.u32 %s33, %s34
      %p36 = scmp.eq.s32.totalorder %s35, 0
      %s38 = sadd.s32 %s37, 1
      %s39 = scalar_select %p36, %s37, %s38
      %p42 = pneg %p36
      %p43 = scmp.eq.s32.totalorder %s13, 1
      %p44 = por %p42, %p43
      %p45 = scmp.ne.s32.totalorder %s37, %s40
      %p46 = scmp.eq.s32.totalorder %s13, 0
      %p47 = por %p45, %p46
      %p48 = scmp.ne.s32.totalorder %s37, %s40
      %p49 = scmp.eq.s32.totalorder %s18, 1
      %p50 = por %p48, %p49
      %p51 = scmp.ne.s32.totalorder %s40, %s41
      %p52 = scmp.eq.s32.totalorder %s18, 0
      %p53 = por %p51, %p52
      %p54 = scmp.ne.s32.totalorder %s40, %s41
      %p55 = scmp.eq.s32.totalorder %s19, 1
      %p56 = por %p54, %p55
      %p58 = scmp.ne.s32.totalorder %s41, %s57
      %p59 = scmp.eq.s32.totalorder %s19, 0
      %p60 = por %p58, %p59
      %s62 = sadd.s32 %s61, 1
      %p65 = scmp.eq.s32.totalorder %s13, 1
      %p66 = scmp.ne.s32.totalorder %s61, %s63
      %p67 = scmp.eq.s32.totalorder %s13, 0
      %p68 = por %p66, %p67
      %p69 = scmp.ne.s32.totalorder %s61, %s63
      %p70 = scmp.eq.s32.totalorder %s18, 1
      %p71 = por %p69, %p70
      %p72 = scmp.ne.s32.totalorder %s63, %s64
      %p73 = scmp.eq.s32.totalorder %s18, 0
      %p74 = por %p72, %p73
      %p75 = scmp.ne.s32.totalorder %s63, %s64
      %p76 = scmp.eq.s32.totalorder %s19, 1
      %p77 = por %p75, %p76
      %p79 = scmp.ne.s32.totalorder %s64, %s78
      %p80 = scmp.eq.s32.totalorder %s19, 0
      %p81 = por %p79, %p80
      %s83 = sadd.s32 %s82, 1
      %p86 = scmp.eq.s32.totalorder %s13, 1
      %p87 = scmp.ne.s32.totalorder %s82, %s84
      %p88 = scmp.eq.s32.totalorder %s13, 0
      %p89 = por %p87, %p88
      %p90 = scmp.ne.s32.totalorder %s82, %s84
      %p91 = scmp.eq.s32.totalorder %s18, 1
      %p92 = por %p90, %p91
      %p93 = scmp.ne.s32.totalorder %s84, %s85
      %p94 = scmp.eq.s32.totalorder %s18, 0
      %p95 = por %p93, %p94
      %p96 = scmp.ne.s32.totalorder %s84, %s85
      %p97 = scmp.eq.s32.totalorder %s19, 1
      %p98 = por %p96, %p97
      %p100 = scmp.ne.s32.totalorder %s85, %s99
      %p101 = scmp.eq.s32.totalorder %s19, 0
      %p102 = por %p100, %p101
      %s103 = ssub.s32 %s20, %s32
      %s104 = ssub.s32 %s21, %s28
      %s105 = sor.u32 %s103, %s104
      %p106 = scmp.eq.s32.totalorder %s105, 0
      %s108 = sadd.s32 %s107, 1
      %s109 = scalar_select %p106, %s107, %s108
      %p112 = pneg %p106
      %p113 = scmp.eq.s32.totalorder %s13, 1
      %p114 = por %p112, %p113
      %p115 = scmp.ne.s32.totalorder %s107, %s110
      %p116 = scmp.eq.s32.totalorder %s13, 0
      %p117 = por %p115, %p116
      %p118 = scmp.ne.s32.totalorder %s107, %s110
      %p119 = scmp.eq.s32.totalorder %s18, 1
      %p120 = por %p118, %p119
      %p121 = scmp.ne.s32.totalorder %s110, %s111
      %p122 = scmp.eq.s32.totalorder %s18, 0
      %p123 = por %p121, %p122
      %p124 = scmp.ne.s32.totalorder %s110, %s111
      %p125 = scmp.eq.s32.totalorder %s19, 1
      %p126 = por %p124, %p125
      %p128 = scmp.ne.s32.totalorder %s111, %s127
      %p129 = scmp.eq.s32.totalorder %s19, 0
      %p130 = por %p128, %p129
      %p131 = scmp.le.s32.totalorder 1, %s13
      %p132 = scmp.lt.s32.totalorder %s13, 3
      %p133 = pnand %p131, %p132
      %p134 = pneg %p133
      // Predicated region
      $region9: #{tpu_custom_call.1} parent=5 // pred_check
        _
      $region10: #{tpu_custom_call.1} parent=5 // pred_check_branch
        %136 = sbr.rel (%p133) target = $region12
      $region11: #{tpu_custom_call.1} parent=5 // pred_region
        %s137 = ssub.s32 %s13, 1
        // Predicated region
        $region13: #{tpu_custom_call.1} parent=11 // pred_check
          %p138 = pneg %p74
        $region14: #{tpu_custom_call.1} parent=11 // pred_check_branch
          %140 = sbr.rel (%p138) target = $region16
        $region15: #{tpu_custom_call.1} parent=11 // pred_region
          %s142 = ssub.s32 128, 128
          %143 = vsyncadd [#allocation4], %s142
          %s145 = sshll.u32 [#allocation3], 4
          %s146 = int_to_ptr.vmem [resolvable:$true] %s145
          %148 = dma.hbm_to_vmem [thread:$0]  %s1, 128, %s146, [#allocation4]
        $region16: #{tpu_custom_call.1} parent=11 // pred_fallthru
          _
        // Predicated region
        $region17: #{tpu_custom_call.1} parent=11 // pred_check
          %p149 = pneg %p95
        $region18: #{tpu_custom_call.1} parent=11 // pred_check_branch
          %151 = sbr.rel (%p149) target = $region20
        $region19: #{tpu_custom_call.1} parent=11 // pred_region
          _
        $region20: #{tpu_custom_call.1} parent=11 // pred_fallthru
          _
      $region12: #{tpu_custom_call.1} parent=5 // pred_fallthru
        _
      %p152 = scmp.lt.s32.totalorder %s13, 2
      // Predicated region
      $region21: #{tpu_custom_call.1} parent=5 // pred_check
        %p153 = pneg %p152
      $region22: #{tpu_custom_call.1} parent=5 // pred_check_branch
        %155 = sbr.rel (%p153) target = $region24
      $region23: #{tpu_custom_call.1} parent=5 // pred_region
        // Predicated region
        $region25: #{tpu_custom_call.1} parent=23 // pred_check
          %p156 = pneg %p47
        $region26: #{tpu_custom_call.1} parent=23 // pred_check_branch
          %158 = sbr.rel (%p156) target = $region28
        $region27: #{tpu_custom_call.1} parent=23 // pred_region
          %p159 = scmp.lt.s32.totalorder %s20, 1
          %s160 = scalar_select %p159, %s20, 1
          %p161 = scmp.lt.s32.totalorder %s21, 0
          %s162 = scalar_select %p161, %s21, 0
          %s163 = sadd.s32 %s162, %s160
          %s164 = smul.addr %s163, 4
          %s165 = scalar_lea.vmem %s0, %s164
        $region28: #{tpu_custom_call.1} parent=23 // pred_fallthru
          _
      $region24: #{tpu_custom_call.1} parent=5 // pred_fallthru
        _
      %p166 = scmp.le.s32.totalorder 1, %s13
      %p167 = scmp.lt.s32.totalorder %s13, 3
      %p168 = pnand %p166, %p167
      %p169 = pneg %p168
      // Predicated region
      $region29: #{tpu_custom_call.1} parent=5 // pred_check
        _
      $region30: #{tpu_custom_call.1} parent=5 // pred_check_branch
        %171 = sbr.rel (%p168) target = $region32
      $region31: #{tpu_custom_call.1} parent=5 // pred_region
        %s172 = ssub.s32 %s13, 1
        // Predicated region
        $region33: #{tpu_custom_call.1} parent=31 // pred_check
          %p173 = pneg %p74
        $region34: #{tpu_custom_call.1} parent=31 // pred_check_branch
          %175 = sbr.rel (%p173) target = $region36
        $region35: #{tpu_custom_call.1} parent=31 // pred_region
          %176 = dma.done [#allocation4], 128
        $region36: #{tpu_custom_call.1} parent=31 // pred_fallthru
          _
        %p177 = scmp.lt.s32.totalorder %s22, 1
        %s178 = scalar_select %p177, %s22, 1
        %p179 = scmp.lt.s32.totalorder %s23, 0
        %s180 = scalar_select %p179, %s23, 0
        %s181 = sadd.s32 %s180, %s178
        %s182 = smul.addr %s181, 4
        %s183 = scalar_lea.vmem %s0, %s182
        %p184 = pneg %p53
        %p185 = pneg %p50
        %p186 = pneg %p74
        %p187 = pneg %p71
        %p188 = pneg %p95
        %p189 = pneg %p92
        %p190 = pneg %p123
        %p191 = pneg %p120
        %s192 = sand.u32 %s110, 1
        %s193 = scalar_lea.sflag [#allocation5], %s192
        %s194 = sand.u32 %s110, 1
        %s195 = smul.addr %s194, 8
        %s196 = scalar_lea.vmem [#allocation6], %s195
        %p197 = scmp.lt.s32.totalorder %s22, 1
        %s198 = scalar_select %p197, %s22, 1
        %p199 = scmp.lt.s32.totalorder %s23, 0
        %s200 = scalar_select %p199, %s23, 0
        %s201 = sadd.s32 %s200, %s198
        %s202 = smul.addr %s201, 4
        %s203 = scalar_lea.vmem %s0, %s202
        %p204 = scmp.eq.s32.totalorder %s23, 0
        // Predicated region
        $region37: #{tpu_custom_call.1} parent=31 // pred_check
          %p205 = pneg %p204
        $region38: #{tpu_custom_call.1} parent=31 // pred_check_branch
          %207 = sbr.rel (%p205) target = $region40
        $region39: #{tpu_custom_call.1} parent=31 // pred_region
          %208 = vst [vmem:[#allocation2] sm:$0xf] 0.0
        $region40: #{tpu_custom_call.1} parent=31 // pred_fallthru
          _
        %v209 = vld [vmem:[%s203] sm:$0xf]
        %v210 = vld [vmem:[#allocation2] sm:$0xf]
        %vm211 = vcmask 1043456
        %v212 = vsel %vm211, %v210, 0.0
        %v213 = vsel %vm211, %v209, 0.0
        %216 = vrot.lane.b32.xlu0 %v212, 126
        %v217 = vpop.permute.xlu0 %216
        %218 = vrot.lane.b32.xlu0 %v213, 126
        %v219 = vpop.permute.xlu0 %218
        %vm220 = vcmask 1031168
        %v221 = vsel %vm220, %v217, %v219
        %222 = vrot.lane.b32.xlu0 %v213, 124
        %v223 = vpop.permute.xlu0 %222
        %v224 = vld [vmem:[#allocation3] sm:$0xff]
        %v225 = vld [vmem:[%s2] sm:$0xff]
        %227 = vset.pattern.permute.xlu0 0
        %228 = vperm.xlu0 %227, %v225
        %v229 = vpop.permute.xlu0 %228
        %231 = vrot.lane.b32.xlu0 %v212, 4
        %v232 = vpop.permute.xlu0 %231
        %233 = vrot.lane.b32.xlu0 %v213, 4
        %v234 = vpop.permute.xlu0 %233
        %235 = vrot.lane.b32.xlu0 %v221, 4
        %v236 = vpop.permute.xlu0 %235
        %237 = vrot.lane.b32.xlu0 %v219, 4
        %v238 = vpop.permute.xlu0 %237
        %239 = vrot.lane.b32.xlu0 %v223, 4
        %v240 = vpop.permute.xlu0 %239
        %vm241 = vcmask 31744
        %v242 = vsel %vm241, %v232, %v234
        %v243 = vsel %vm241, %v236, %v238
        %vm247 = vcmask 195584
        %v249 = vsel %vm247, %v224, 0
        %251 = vmatprep.subr.mxu0 0.0
        %252 = vmatpush1.msra.mxu0 %v242
        %253 = vmatprep.subr.mxu0 0.0
        %254 = vmatpush1.msra.mxu0 %v243
        %255 = vmatprep.subr.mxu0 0.0
        %256 = vmatpush1.msra.mxu0 %v240
        %257 = vmatprep.subr.mxu0 0.0
        %258 = vmatpush1.msra.mxu0 0.0
        %259 = vmatprep.subr.mxu0 0.0
        %260 = vmatpush1.msra.mxu0 0.0
        %261 = vmatprep.subr.mxu0 0.0
        %262 = vmatpush1.msra.mxu0 0.0
        %263 = vmatprep.subr.mxu0 0.0
        %264 = vmatpush1.msra.mxu0 0.0
        %265 = vmatprep.subr.mxu0 0.0
        %266 = vmatpush1.msra.mxu0 0.0
        %267 = vmatprep.subr.mxu0 0.0
        %268 = vmatpush1.msra.mxu0 0.0
        %269 = vmatprep.subr.mxu0 0.0
        %270 = vmatpush1.msra.mxu0 0.0
        %271 = vmatprep.subr.mxu0 0.0
        %272 = vmatpush1.msra.mxu0 0.0
        %273 = vmatprep.subr.mxu0 0.0
        %274 = vmatpush1.msra.mxu0 0.0
        %275 = vmatprep.subr.mxu0 0.0
        %276 = vmatpush1.msra.mxu0 0.0
        %277 = vmatprep.subr.mxu0 0.0
        %278 = vmatpush1.msra.mxu0 0.0
        %279 = vmatprep.subr.mxu0 0.0
        %280 = vmatpush1.msra.mxu0 0.0
        %281 = vmatprep.subr.mxu0 0.0
        %282 = vmatpush1.msra.mxu0 0.0
        %283 = vmatprep.subr.mxu0 0.0
        %284 = vmatpush1.msra.mxu0 0.0
        %285 = vmatprep.subr.mxu0 0.0
        %286 = vmatpush1.msra.mxu0 0.0
        %287 = vmatprep.subr.mxu0 0.0
        %288 = vmatpush1.msra.mxu0 0.0
        %289 = vmatprep.subr.mxu0 0.0
        %290 = vmatpush1.msra.mxu0 0.0
        %291 = vmatprep.subr.mxu0 0.0
        %292 = vmatpush1.msra.mxu0 0.0
        %293 = vmatprep.subr.mxu0 0.0
        %294 = vmatpush1.msra.mxu0 0.0
        %295 = vmatprep.subr.mxu0 0.0
        %296 = vmatpush1.msra.mxu0 0.0
        %297 = vmatprep.subr.mxu0 0.0
        %298 = vmatpush1.msra.mxu0 0.0
        %299 = vmatprep.subr.mxu0 0.0
        %300 = vmatpush1.msra.mxu0 0.0
        %301 = vmatprep.subr.mxu0 0.0
        %302 = vmatpush1.msra.mxu0 0.0
        %303 = vmatprep.subr.mxu0 0.0
        %304 = vmatpush1.msra.mxu0 0.0
        %305 = vmatprep.subr.mxu0 0.0
        %306 = vmatpush1.msra.mxu0 0.0
        %307 = vmatprep.subr.mxu0 0.0
        %308 = vmatpush1.msra.mxu0 0.0
        %309 = vmatprep.subr.mxu0 0.0
        %310 = vmatpush1.msra.mxu0 0.0
        %311 = vmatprep.subr.mxu0 0.0
        %312 = vmatpush1.msra.mxu0 0.0
        %313 = vmatprep.subr.mxu0 0.0
        %314 = vmatpush1.msra.mxu0 0.0
        %315 = vmatprep.mubr.f32.mxu0 0.0
        %316 = vmatmul.mubr.f32.gmra.mrb[0].mxu0 %v249
        %v317 = vpop.f32.mrb[0].mxu0
        %v318 = vadd.f32 %v229, %v317
        %v319 = vpop.f32.mrb[0].mxu0
        %320 = vdwg.mxu0
        %vm321 = vcmask 130048
        %322 = vst.msk [vmem:[%s196] sm:$0xff] %vm321, %v318
        %s323 = sand.u32 %s110, 1
        %s324 = scalar_lea.sflag [#allocation5], %s323
        %s325 = sand.u32 %s110, 1
        %s326 = smul.addr %s325, 8
        %s327 = scalar_lea.vmem [#allocation6], %s326
        // Predicated region
        $region41: #{tpu_custom_call.1} parent=31 // pred_check
          %p328 = pneg %p120
        $region42: #{tpu_custom_call.1} parent=31 // pred_check_branch
          %330 = sbr.rel (%p328) target = $region44
        $region43: #{tpu_custom_call.1} parent=31 // pred_region
          %s332 = ssub.s32 128, 128
          %333 = vsyncadd %s324, %s332
          %s334 = sadd.s32 %s23, %s22
          %s335 = smul.addr %s334, 128
          %s336 = scalar_lea.hbm %s3, %s335
          %s338 = sshll.u32 %s327, 4
          %s339 = int_to_ptr.vmem [resolvable:$true] %s338
          %341 = dma.vmem_to_hbm [thread:$0]  %s339, 128, %s336, %s324
        $region44: #{tpu_custom_call.1} parent=31 // pred_fallthru
          _
      $region32: #{tpu_custom_call.1} parent=5 // pred_fallthru
        _
      %p342 = scmp.le.s32.totalorder 2, %s13
      // Predicated region
      $region45: #{tpu_custom_call.1} parent=5 // pred_check
        %p343 = pneg %p342
      $region46: #{tpu_custom_call.1} parent=5 // pred_check_branch
        %345 = sbr.rel (%p343) target = $region48
      $region47: #{tpu_custom_call.1} parent=5 // pred_region
        %s346 = ssub.s32 %s13, 2
        // Predicated region
        $region49: #{tpu_custom_call.1} parent=47 // pred_check
          %p347 = pneg %p126
        $region50: #{tpu_custom_call.1} parent=47 // pred_check_branch
          %349 = sbr.rel (%p347) target = $region52
        $region51: #{tpu_custom_call.1} parent=47 // pred_region
          %s350 = sand.u32 %s111, 1
          %s351 = scalar_lea.sflag [#allocation5], %s350
          %s352 = sand.u32 %s111, 1
          %s353 = smul.addr %s352, 8
          %s354 = scalar_lea.vmem [#allocation6], %s353
          %355 = dma.done %s351, 128
        $region52: #{tpu_custom_call.1} parent=47 // pred_fallthru
          _
      $region48: #{tpu_custom_call.1} parent=5 // pred_fallthru
        _
    $region6: #{tpu_custom_call.1} parent=1 // loop_footer
      %s17 = sadd.s32 1, %s13
    $region7: #{tpu_custom_call.1} parent=1 // loop_footer_branch
      %12 = sbr.rel target = $region3
    $region8: #{tpu_custom_call.1} parent=1 // loop_exit
      _
    %356 = vsyncpa [#allocation4], 1
    %s357 = scalar_lea.sflag [#allocation4], 1
    %358 = vsyncpa %s357, 1
    %359 = vsyncpa [#allocation5], 1
    %s360 = scalar_lea.sflag [#allocation5], 1
    %361 = vsyncpa %s360, 1

</llo_original>
